<compile_context>
chip_gen: v5e
topology: v5e:2x2
jax: 0.10.0
libtpu: 0.0.40
codegen_flags: <defaults>
</compile_context>

<pallas_src>
import math
import functools

import jax
import jax.numpy as jnp
from jax.experimental import pallas as pl
from jax.experimental.pallas import tpu as pltpu
from jax.scipy.special import erf

_INV_SQRT2 = 1.0 / math.sqrt(2.0)


# ----------------------------------------------------------------------------
# small helpers
# ----------------------------------------------------------------------------
def _round_up(n, m):
    return ((n + m - 1) // m) * m


def _pad_axis(x, axis, new_size, value=0.0):
    pad = new_size - x.shape[axis]
    if pad <= 0:
        return x
    widths = [(0, 0)] * x.ndim
    widths[axis] = (0, pad)
    return jnp.pad(x, widths, constant_values=value)


@functools.lru_cache(maxsize=None)
def _vmem_limit():
    # Per-generation scoped-VMEM budget: ~96 MiB on v5e/v6e (128 MiB physical VMEM),
    # ~48 MiB on v7x (64 MiB physical VMEM).
    try:
        cap = int(pltpu.get_tpu_info().vmem_capacity_bytes)
    except Exception:
        cap = 64 * 1024 * 1024
    return max(32 * 1024 * 1024, (3 * cap) // 4)


def _lane_cap():
    # Bigger lane tiles on the 128 MiB-VMEM parts; cap at 2048 on v7x (64 MiB).
    return 2048 if _vmem_limit() <= 48 * 1024 * 1024 else 8192


def _pick_tile(n, cap):
    # n is a multiple of 128; largest multiple-of-128 divisor of n that is <= cap.
    n128 = n // 128
    best = 128
    for k in range(1, n128 + 1):
        if n128 % k == 0 and k * 128 <= cap:
            best = k * 128
    return best


def _lane_tile(n, per_lane_bytes, budget):
    cap = min(_lane_cap(), max(128, budget // max(per_lane_bytes, 1)))
    return _pick_tile(n, cap)


def _cout_tile(cout_p, tm):
    # Largest multiple-of-16 divisor of cout_p keeping 3 f32 accumulators of shape
    # (cout_tile, tm) well inside the 256 KiB vreg file.
    cap = max(16, (128 * 1024) // (3 * tm * 4))
    best = 16
    d = 16
    while d <= min(cout_p, cap):
        if cout_p % d == 0:
            best = d
        d += 16
    return best


# ----------------------------------------------------------------------------
# Kernel 1: complex spectral mixing  out[c,b,o,m] = sum_i x[c,b,i,m] * w[c,i,o,m]
#   Karatsuba (3-mul) complex product, f32 accumulators, bf16 weights, Cout tiled
#   in-kernel, Cin via lax.fori_loop.  Grid = (corner, mode-tile, batch) with batch
#   innermost so weight blocks are not re-fetched per batch element.
# ----------------------------------------------------------------------------
def spectral_mix_kernel(xr_ref, xi_ref, w0_ref, w1_ref, or_ref, oi_ref,
                        *, cin, cout_p, cout_tile, unroll):
    tm = or_ref.shape[-1]
    n_chunks = cout_p // cout_tile

    for co in range(n_chunks):                      # small static loop (1-4 chunks)
        co0 = co * cout_tile

        def body(i, carry, co0=co0):
            rr, ii, tt = carry
            xr_i = xr_ref[pl.ds(i, 1), :]                                   # (1, TM)
            xi_i = xi_ref[pl.ds(i, 1), :]
            w0_i = w0_ref[pl.ds(i, 1), pl.ds(co0, cout_tile), :][0]
            w1_i = w1_ref[pl.ds(i, 1), pl.ds(co0, cout_tile), :][0]
            w0_i = w0_i.astype(jnp.float32)                                 # (CO_T, TM)
            w1_i = w1_i.astype(jnp.float32)
            rr = rr + xr_i * w0_i
            ii = ii + xi_i * w1_i
            tt = tt + (xr_i + xi_i) * (w0_i + w1_i)
            return rr, ii, tt

        zeros = jnp.zeros((cout_tile, tm), jnp.float32)
        rr, ii, tt = jax.lax.fori_loop(0, cin, body, (zeros, zeros, zeros),
                                       unroll=unroll)
        or_ref[pl.ds(co0, cout_tile), :] = rr - ii                          # real
        oi_ref[pl.ds(co0, cout_tile), :] = tt - rr - ii                     # imag


def spectral_mix(xr, xi, w0, w1):
    # xr, xi : (4, B, Cin, M)   w0, w1 : (4, Cin, Cout, M)
    NC, B, Cin, M = xr.shape
    Cout = w0.shape[2]
    Cin_p = _round_up(Cin, 8)
    Cout_p = _round_up(Cout, 16)          # bf16 weight sublane packing
    M_p = _round_up(M, 128)               # lane-dense stores

    xr_p = _pad_axis(_pad_axis(xr, 2, Cin_p), 3, M_p).astype(jnp.float32)
    xi_p = _pad_axis(_pad_axis(xi, 2, Cin_p), 3, M_p).astype(jnp.float32)
    w0_p = _pad_axis(_pad_axis(_pad_axis(w0, 1, Cin_p), 2, Cout_p), 3, M_p)
    w1_p = _pad_axis(_pad_axis(_pad_axis(w1, 1, Cin_p), 2, Cout_p), 3, M_p)
    w0_p = w0_p.astype(jnp.bfloat16)      # dominant HBM traffic -> bf16
    w1_p = w1_p.astype(jnp.bfloat16)

    vlim = _vmem_limit()
    budget = vlim // 2
    cap = min(512, _lane_cap())           # keep accumulators in the vreg file

    def w_dbl_bytes(tm):                  # w0+w1, double-buffered, bf16
        return 2 * 2 * Cin_p * Cout_p * tm * 2

    TM = _pick_tile(M_p, cap)
    while cap > 128 and w_dbl_bytes(_pick_tile(M_p, cap)) > budget:
        cap //= 2
        TM = _pick_tile(M_p, cap)

    cout_tile = _cout_tile(Cout_p, TM)
    grid = (NC, M_p // TM, B)             # batch innermost -> weight blocks reused

    kernel = functools.partial(spectral_mix_kernel, cin=Cin, cout_p=Cout_p,
                               cout_tile=cout_tile, unroll=(Cin <= 8))
    out_r, out_i = pl.pallas_call(
        kernel,
        out_shape=[jax.ShapeDtypeStruct((NC, B, Cout_p, M_p), jnp.float32)] * 2,
        grid=grid,
        in_specs=[
            pl.BlockSpec((None, None, Cin_p, TM), lambda c, m, b: (c, b, 0, m)),
            pl.BlockSpec((None, None, Cin_p, TM), lambda c, m, b: (c, b, 0, m)),
            pl.BlockSpec((None, Cin_p, Cout_p, TM), lambda c, m, b: (c, 0, 0, m)),
            pl.BlockSpec((None, Cin_p, Cout_p, TM), lambda c, m, b: (c, 0, 0, m)),
        ],
        out_specs=[
            pl.BlockSpec((None, None, Cout_p, TM), lambda c, m, b: (c, b, 0, m)),
            pl.BlockSpec((None, None, Cout_p, TM), lambda c, m, b: (c, b, 0, m)),
        ],
        compiler_params=pltpu.CompilerParams(
            dimension_semantics=("parallel", "parallel", "arbitrary"),
            vmem_limit_bytes=vlim),
    )(xr_p, xi_p, w0_p, w1_p)
    return out_r[:, :, :Cout, :M], out_i[:, :, :Cout, :M]


# ----------------------------------------------------------------------------
# Kernel 2: 1x1x1 Conv3d == per-voxel channel matmul + bias (bf16 in, f32 acc).
# ----------------------------------------------------------------------------
def pw_conv_kernel(x_ref, w_ref, b_ref, o_ref):
    x = x_ref[0]                                                  # (Cin_p, TS) bf16
    w = w_ref[...]                                                # (Cout_p, Cin_p) bf16
    y = jnp.dot(w, x, preferred_element_type=jnp.float32)         # (Cout_p, TS) f32
    o_ref[0] = y + b_ref[...]                                     # bias (Cout_p, 1)


def pw_conv(x_flat, w, bias):
    B, Cin, S = x_flat.shape
    Cout = w.shape[0]
    Cin_p = _round_up(Cin, 16)            # bf16 sublane packing
    Cout_p = _round_up(Cout, 16)
    S_p = _round_up(S, 128)

    x_p = _pad_axis(_pad_axis(x_flat, 1, Cin_p), 2, S_p).astype(jnp.bfloat16)
    w_p = _pad_axis(_pad_axis(w, 0, Cout_p), 1, Cin_p).astype(jnp.bfloat16)
    b_p = _pad_axis(bias.reshape(Cout, 1), 0, Cout_p).astype(jnp.float32)

    vlim = _vmem_limit()
    per_lane = 2 * Cin_p * 2 + 2 * Cout_p * 4      # x bf16 + out f32, double-buffered
    TS = _lane_tile(S_p, per_lane, vlim // 2)
    grid = (B, S_p // TS)

    out = pl.pallas_call(
        pw_conv_kernel,
        out_shape=jax.ShapeDtypeStruct((B, Cout_p, S_p), jnp.float32),
        grid=grid,
        in_specs=[
            pl.BlockSpec((1, Cin_p, TS), lambda b, s: (b, 0, s)),
            pl.BlockSpec((Cout_p, Cin_p), lambda b, s: (0, 0)),
            pl.BlockSpec((Cout_p, 1), lambda b, s: (0, 0)),
        ],
        out_specs=pl.BlockSpec((1, Cout_p, TS), lambda b, s: (b, 0, s)),
        compiler_params=pltpu.CompilerParams(
            dimension_semantics=("parallel", "parallel"),
            vmem_limit_bytes=vlim),
    )(x_p, w_p, b_p)
    return out[:, :Cout, :S]


# ----------------------------------------------------------------------------
# Kernel 3: (x1 + x2) -> InstanceNorm3d(affine, eps=1e-5) -> exact GELU.
#   Path A (default): single pallas_call, grid (B, 2, S//TS).  The p==0 sweep caches
#   y = x1+x2 in a per-batch VMEM scratch while accumulating sum / sum-of-squares; the
#   p==1 sweep normalizes from the scratch.  Input/output index_maps are pinned during
#   the sweep that does not need them, so x1/x2 are read once and out is written once.
#   Path B (fallback when the scratch would not fit VMEM): stats call + normalize call.
# ----------------------------------------------------------------------------
def fuse_cached_kernel(x1_ref, x2_ref, g_ref, b_ref, o_ref,
                       y_ref, mu_ref, rs_ref, *, total_s, ts):
    p = pl.program_id(1)
    s = pl.program_id(2)
    n_s = pl.num_programs(2)

    @pl.when((p == 0) & (s == 0))
    def _():
        mu_ref[...] = jnp.zeros_like(mu_ref)
        rs_ref[...] = jnp.zeros_like(rs_ref)

    @pl.when(p == 0)
    def _():
        y = x1_ref[0] + x2_ref[0]                                 # (C_p, TS)
        off = pl.multiple_of(s * ts, ts)
        y_ref[:, pl.ds(off, ts)] = y
        mu_ref[...] += jnp.sum(y, axis=-1, keepdims=True)
        rs_ref[...] += jnp.sum(y * y, axis=-1, keepdims=True)

    @pl.when((p == 0) & (s == n_s - 1))
    def _():
        inv_n = 1.0 / float(total_s)
        mean = mu_ref[...] * inv_n
        var = jnp.maximum(rs_ref[...] * inv_n - mean * mean, 0.0)  # biased variance
        mu_ref[...] = mean
        rs_ref[...] = jax.lax.rsqrt(var + 1e-5)

    @pl.when(p == 1)
    def _():
        off = pl.multiple_of(s * ts, ts)
        y = y_ref[:, pl.ds(off, ts)]
        z = g_ref[...] * ((y - mu_ref[...]) * rs_ref[...]) + b_ref[...]
        # exact (erf) GELU to match F.gelu default
        o_ref[0] = 0.5 * z * (1.0 + erf(z * _INV_SQRT2))


def fuse_stats_kernel(x1_ref, x2_ref, sum_ref, sq_ref):
    s = pl.program_id(1)
    y = x1_ref[0] + x2_ref[0]

    @pl.when(s == 0)
    def _():
        sum_ref[0] = jnp.zeros_like(sum_ref[0])
        sq_ref[0] = jnp.zeros_like(sq_ref[0])

    sum_ref[0] += jnp.sum(y, axis=-1, keepdims=True)
    sq_ref[0] += jnp.sum(y * y, axis=-1, keepdims=True)


def fuse_apply_kernel(x1_ref, x2_ref, mu_ref, rs_ref, g_ref, b_ref, o_ref):
    y = x1_ref[0] + x2_ref[0]
    z = g_ref[...] * ((y - mu_ref[0]) * rs_ref[0]) + b_ref[...]
    o_ref[0] = 0.5 * z * (1.0 + erf(z * _INV_SQRT2))


def fuse_norm_gelu(x1_flat, x2_flat, gamma, beta):
    B, C, S = x1_flat.shape
    C_p = _round_up(C, 8)
    S_p = _round_up(S, 128)

    x1_p = _pad_axis(_pad_axis(x1_flat, 1, C_p), 2, S_p)
    x2_p = _pad_axis(_pad_axis(x2_flat, 1, C_p), 2, S_p)
    g_p = _pad_axis(gamma.reshape(C, 1).astype(jnp.float32), 0, C_p, value=1.0)
    b_p = _pad_axis(beta.reshape(C, 1).astype(jnp.float32), 0, C_p, value=0.0)

    vlim = _vmem_limit()
    cache_bytes = C_p * S_p * 4

    if cache_bytes <= vlim // 3:
        # ---- Path A: one read, one write, y cached in VMEM per batch element ----
        per_lane = 6 * C_p * 4                     # x1, x2, out, double-buffered
        TS = _lane_tile(S_p, per_lane, (vlim - cache_bytes) // 2)
        n_sb = S_p // TS
        grid = (B, 2, n_sb)

        in_idx = lambda b, p, s: (b, 0, s * (1 - p) + (n_sb - 1) * p)
        out_idx = lambda b, p, s: (b, 0, s * p)

        kernel = functools.partial(fuse_cached_kernel, total_s=S, ts=TS)
        out = pl.pallas_call(
            kernel,
            out_shape=jax.ShapeDtypeStruct((B, C_p, S_p), jnp.float32),
            grid=grid,
            in_specs=[
                pl.BlockSpec((1, C_p, TS), in_idx),
                pl.BlockSpec((1, C_p, TS), in_idx),
                pl.BlockSpec((C_p, 1), lambda b, p, s: (0, 0)),
                pl.BlockSpec((C_p, 1), lambda b, p, s: (0, 0)),
            ],
            out_specs=pl.BlockSpec((1, C_p, TS), out_idx),
            scratch_shapes=[pltpu.VMEM((C_p, S_p), jnp.float32),
                            pltpu.VMEM((C_p, 1), jnp.float32),
                            pltpu.VMEM((C_p, 1), jnp.float32)],
            compiler_params=pltpu.CompilerParams(
                dimension_semantics=("parallel", "arbitrary", "arbitrary"),
                vmem_limit_bytes=vlim),
        )(x1_p, x2_p, g_p, b_p)
        return out[:, :C, :S]

    # ---- Path B: stats call (tiny output) + normalize call ----
    per_lane = 4 * C_p * 4
    TS = _lane_tile(S_p, per_lane, vlim // 2)
    grid = (B, S_p // TS)

    sums, sqs = pl.pallas_call(
        fuse_stats_kernel,
        out_shape=[jax.ShapeDtypeStruct((B, C_p, 1), jnp.float32)] * 2,
        grid=grid,
        in_specs=[pl.BlockSpec((1, C_p, TS), lambda b, s: (b, 0, s)),
                  pl.BlockSpec((1, C_p, TS), lambda b, s: (b, 0, s))],
        out_specs=[pl.BlockSpec((1, C_p, 1), lambda b, s: (b, 0, 0)),
                   pl.BlockSpec((1, C_p, 1), lambda b, s: (b, 0, 0))],
        compiler_params=pltpu.CompilerParams(
            dimension_semantics=("parallel", "arbitrary"),
            vmem_limit_bytes=vlim),
    )(x1_p, x2_p)

    mean = sums / float(S)
    var = jnp.maximum(sqs / float(S) - mean * mean, 0.0)
    rstd = jax.lax.rsqrt(var + 1e-5)

    out = pl.pallas_call(
        fuse_apply_kernel,
        out_shape=jax.ShapeDtypeStruct((B, C_p, S_p), jnp.float32),
        grid=grid,
        in_specs=[
            pl.BlockSpec((1, C_p, TS), lambda b, s: (b, 0, s)),
            pl.BlockSpec((1, C_p, TS), lambda b, s: (b, 0, s)),
            pl.BlockSpec((1, C_p, 1), lambda b, s: (b, 0, 0)),
            pl.BlockSpec((1, C_p, 1), lambda b, s: (b, 0, 0)),
            pl.BlockSpec((C_p, 1), lambda b, s: (0, 0)),
            pl.BlockSpec((C_p, 1), lambda b, s: (0, 0)),
        ],
        out_specs=pl.BlockSpec((1, C_p, TS), lambda b, s: (b, 0, s)),
        compiler_params=pltpu.CompilerParams(
            dimension_semantics=("parallel", "parallel"),
            vmem_limit_bytes=vlim),
    )(x1_p, x2_p, mean, rstd, g_p, b_p)
    return out[:, :C, :S]


# ----------------------------------------------------------------------------
# SpectralConv3d_UNO forward (FFT glue in JAX, all-corner mode mixing in one Pallas call)
# ----------------------------------------------------------------------------
def spectral_conv3d_forward(x, spec_w, modes, d1, d2, d3, out_ch):
    B, Cin = x.shape[0], x.shape[1]
    m1, m2, m3 = modes
    M = m1 * m2 * m3
    assert 2 * m1 <= d1 and 2 * m2 <= d2 and m3 <= d3 // 2 + 1, "corner slices overlap"

    # TODO(synk): FFTs have no Pallas TPU equivalent; computed with jnp.fft.
    x_ft = jnp.fft.rfftn(x, axes=(-3, -2, -1), norm="forward")

    corner_slices = [
        (slice(0, m1), slice(0, m2)),
        (slice(-m1, None), slice(0, m2)),
        (slice(0, m1), slice(-m2, None)),
        (slice(-m1, None), slice(-m2, None)),
    ]

    xr_list, xi_list = [], []
    for (s1, s2) in corner_slices:
        blk = x_ft[:, :, s1, s2, :m3]
        xr_list.append(jnp.real(blk).reshape(B, Cin, M))
        xi_list.append(jnp.imag(blk).reshape(B, Cin, M))
    xr = jnp.stack(xr_list, axis=0).astype(jnp.float32)
    xi = jnp.stack(xi_list, axis=0).astype(jnp.float32)
    w0 = jnp.stack([w[0].reshape(Cin, out_ch, M) for w in spec_w], axis=0)
    w1 = jnp.stack([w[1].reshape(Cin, out_ch, M) for w in spec_w], axis=0)

    mix_r, mix_i = spectral_mix(xr, xi, w0, w1)        # (4, B, Cout, M)

    out_r = jnp.zeros((B, out_ch, d1, d2, d3 // 2 + 1), jnp.float32)
    out_i = jnp.zeros_like(out_r)
    for k, (s1, s2) in enumerate(corner_slices):
        r = mix_r[k].reshape(B, out_ch, m1, m2, m3)
        im = mix_i[k].reshape(B, out_ch, m1, m2, m3)
        out_r = out_r.at[:, :, s1, s2, :m3].set(r)
        out_i = out_i.at[:, :, s1, s2, :m3].set(im)

    out_ft = jax.lax.complex(out_r, out_i)
    return jnp.fft.irfftn(out_ft, s=(d1, d2, d3), axes=(-3, -2, -1), norm="forward")


# ----------------------------------------------------------------------------
# pointwise_op_3D forward (1x1 conv in Pallas, FFT low-pass in JAX)
# ----------------------------------------------------------------------------
def pointwise_op_forward(x, conv_w, conv_b, dim1, dim2, dim3):
    B, Cin, S1, S2, S3 = x.shape
    Cout = conv_w.shape[0]
    x_flat = x.reshape(B, Cin, S1 * S2 * S3)
    y = pw_conv(x_flat, conv_w, conv_b).reshape(B, Cout, S1, S2, S3)

    # TODO(synk): rfftn/irfftn low-pass has no Pallas TPU equivalent; computed with jnp.fft.
    ft = jnp.fft.rfftn(y, axes=(-3, -2, -1))                 # default 'backward' norm
    ft_u = jnp.zeros_like(ft)
    h1, h2, h3 = dim1 // 2, dim2 // 2, dim3 // 2
    ft_u = ft_u.at[:, :, :h1, :h2, :h3].set(ft[:, :, :h1, :h2, :h3])
    ft_u = ft_u.at[:, :, -h1:, :h2, :h3].set(ft[:, :, -h1:, :h2, :h3])
    ft_u = ft_u.at[:, :, :h1, -h2:, :h3].set(ft[:, :, :h1, -h2:, :h3])
    ft_u = ft_u.at[:, :, -h1:, -h2:, :h3].set(ft[:, :, -h1:, -h2:, :h3])
    out = jnp.fft.irfftn(ft_u, s=(dim1, dim2, dim3), axes=(-3, -2, -1))
    # F.interpolate(size=(dim1,dim2,dim3), mode='trilinear', align_corners=True)
    # is an exact identity here since `out` already has that spatial size.
    return out


# ----------------------------------------------------------------------------
# OperatorBlock_3D forward
# ----------------------------------------------------------------------------
def operator_block_forward(x, params, out_ch, res, modes):
    d1, d2, d3 = res
    B = x.shape[0]
    x1 = spectral_conv3d_forward(x, params["spec_w"], modes, d1, d2, d3, out_ch)
    x2 = pointwise_op_forward(x, params["conv_w"], params["conv_b"], d1, d2, d3)
    S = d1 * d2 * d3
    out = fuse_norm_gelu(
        x1.reshape(B, out_ch, S).astype(jnp.float32),
        x2.reshape(B, out_ch, S).astype(jnp.float32),
        params["gamma"], params["beta"],
    )
    return out.reshape(B, out_ch, d1, d2, d3)


# ----------------------------------------------------------------------------
# Deterministic parameter init (shapes follow the PyTorch __init__)
# ----------------------------------------------------------------------------
def init_params(key, in_ch, out_ch, m1, m2, m3):
    ks = jax.random.split(key, 6)
    scale = (1.0 / (2.0 * in_ch)) ** 0.5
    wshape = (2, in_ch, out_ch, m1, m2, m3)
    spec_w = [scale * jax.random.uniform(ks[i], wshape, jnp.float32) for i in range(4)]
    bound = 1.0 / math.sqrt(in_ch)                       # Conv3d(k=1) fan_in = in_ch
    conv_w = jax.random.uniform(ks[4], (out_ch, in_ch), jnp.float32, -bound, bound)
    conv_b = jax.random.uniform(ks[5], (out_ch,), jnp.float32, -bound, bound)
    gamma = jnp.ones((out_ch,), jnp.float32)             # InstanceNorm3d affine defaults
    beta = jnp.zeros((out_ch,), jnp.float32)
    return dict(spec_w=spec_w, conv_w=conv_w, conv_b=conv_b, gamma=gamma, beta=beta)


if __name__ == "__main__":
    key = jax.random.PRNGKey(0)
    B, Cin, Cout = 2, 4, 4
    R1 = R2 = R3 = 8          # res1, res2, res3 (input spatial == output spatial)
    M1 = M2 = M3 = 4          # modes1, modes2, modes3 (M3 <= R3//2 + 1)

    kx, kp = jax.random.split(key)
    x = jax.random.normal(kx, (B, Cin, R1, R2, R3), jnp.float32)
    params = init_params(kp, Cin, Cout, M1, M2, M3)

    out = operator_block_forward(x, params, Cout, (R1, R2, R3), (M1, M2, M3))
    out = jax.block_until_ready(out)

    assert out.shape == (B, Cout, R1, R2, R3), out.shape
    assert bool(jnp.all(jnp.isfinite(out)))
    print("KERNEL_OK")
</pallas_src>

<mosaic_0001>
module attributes {stable_mosaic.version = 11 : i64} {
  func.func @spectral_mix_kernel(%arg0: i32, %arg1: i32, %arg2: i32, %arg3: memref<1x1x8x128xf32, #tpu.memory_space<vmem>>, %arg4: memref<1x1x8x128xf32, #tpu.memory_space<vmem>>, %arg5: memref<1x8x16x128xbf16, #tpu.memory_space<vmem>>, %arg6: memref<1x8x16x128xbf16, #tpu.memory_space<vmem>>, %arg7: memref<1x1x16x128xf32, #tpu.memory_space<vmem>>, %arg8: memref<1x1x16x128xf32, #tpu.memory_space<vmem>>) attributes {dimension_semantics = [#tpu.dimension_semantics<parallel>, #tpu.dimension_semantics<parallel>, #tpu.dimension_semantics<arbitrary>], iteration_bounds = array<i64: 4, 1, 2>, scalar_prefetch = 0 : i64, scratch_operands = 0 : i64, tpu.core_type = #tpu.core_type<tc>, window_params = [{transform_indices = @transform_0, window_bounds = array<i64: 1, 1, 8, 128>}, {transform_indices = @transform_1, window_bounds = array<i64: 1, 1, 8, 128>}, {transform_indices = @transform_2, window_bounds = array<i64: 1, 8, 16, 128>}, {transform_indices = @transform_3, window_bounds = array<i64: 1, 8, 16, 128>}, {transform_indices = @transform_4, window_bounds = array<i64: 1, 1, 16, 128>}, {transform_indices = @transform_5, window_bounds = array<i64: 1, 1, 16, 128>}]} {
    %cst = arith.constant 0.000000e+00 : f32
    %0 = vector.broadcast %cst : f32 to vector<16x128xf32>
    %c0_i32 = arith.constant 0 : i32
    %c0 = arith.constant 0 : index
    %c0_0 = arith.constant 0 : index
    %1 = arith.index_cast %c0_i32 : i32 to index
    %c0_1 = arith.constant 0 : index
    %2 = vector.load %arg3[%c0, %c0_0, %1, %c0_1] : memref<1x1x8x128xf32, #tpu.memory_space<vmem>>, vector<1x1x1x128xf32>
    %3 = vector.shape_cast %2 : vector<1x1x1x128xf32> to vector<1x128xf32>
    %c0_2 = arith.constant 0 : index
    %c0_3 = arith.constant 0 : index
    %4 = arith.index_cast %c0_i32 : i32 to index
    %c0_4 = arith.constant 0 : index
    %5 = vector.load %arg4[%c0_2, %c0_3, %4, %c0_4] : memref<1x1x8x128xf32, #tpu.memory_space<vmem>>, vector<1x1x1x128xf32>
    %6 = vector.shape_cast %5 : vector<1x1x1x128xf32> to vector<1x128xf32>
    %c0_5 = arith.constant 0 : index
    %7 = arith.index_cast %c0_i32 : i32 to index
    %c0_6 = arith.constant 0 : index
    %c0_7 = arith.constant 0 : index
    %8 = vector.load %arg5[%c0_5, %7, %c0_6, %c0_7] : memref<1x8x16x128xbf16, #tpu.memory_space<vmem>>, vector<1x1x16x128xbf16>
    %9 = vector.shape_cast %8 : vector<1x1x16x128xbf16> to vector<1x16x128xbf16>
    %10 = vector.shape_cast %9 : vector<1x16x128xbf16> to vector<16x128xbf16>
    %c0_8 = arith.constant 0 : index
    %11 = arith.index_cast %c0_i32 : i32 to index
    %c0_9 = arith.constant 0 : index
    %c0_10 = arith.constant 0 : index
    %12 = vector.load %arg6[%c0_8, %11, %c0_9, %c0_10] : memref<1x8x16x128xbf16, #tpu.memory_space<vmem>>, vector<1x1x16x128xbf16>
    %13 = vector.shape_cast %12 : vector<1x1x16x128xbf16> to vector<1x16x128xbf16>
    %14 = vector.shape_cast %13 : vector<1x16x128xbf16> to vector<16x128xbf16>
    %15 = arith.extf %10 : vector<16x128xbf16> to vector<16x128xf32>
    %16 = arith.extf %14 : vector<16x128xbf16> to vector<16x128xf32>
    %17 = vector.broadcast %3 : vector<1x128xf32> to vector<16x128xf32>
    %18 = arith.mulf %17, %15 : vector<16x128xf32>
    %19 = arith.addf %0, %18 : vector<16x128xf32>
    %20 = vector.broadcast %6 : vector<1x128xf32> to vector<16x128xf32>
    %21 = arith.mulf %20, %16 : vector<16x128xf32>
    %22 = arith.addf %0, %21 : vector<16x128xf32>
    %23 = arith.addf %3, %6 : vector<1x128xf32>
    %24 = arith.addf %15, %16 : vector<16x128xf32>
    %25 = vector.broadcast %23 : vector<1x128xf32> to vector<16x128xf32>
    %26 = arith.mulf %25, %24 : vector<16x128xf32>
    %27 = arith.addf %0, %26 : vector<16x128xf32>
    %c1_i32 = arith.constant 1 : i32
    %c0_11 = arith.constant 0 : index
    %c0_12 = arith.constant 0 : index
    %28 = arith.index_cast %c1_i32 : i32 to index
    %c0_13 = arith.constant 0 : index
    %29 = vector.load %arg3[%c0_11, %c0_12, %28, %c0_13] : memref<1x1x8x128xf32, #tpu.memory_space<vmem>>, vector<1x1x1x128xf32>
    %30 = vector.shape_cast %29 : vector<1x1x1x128xf32> to vector<1x128xf32>
    %c0_14 = arith.constant 0 : index
    %c0_15 = arith.constant 0 : index
    %31 = arith.index_cast %c1_i32 : i32 to index
    %c0_16 = arith.constant 0 : index
    %32 = vector.load %arg4[%c0_14, %c0_15, %31, %c0_16] : memref<1x1x8x128xf32, #tpu.memory_space<vmem>>, vector<1x1x1x128xf32>
    %33 = vector.shape_cast %32 : vector<1x1x1x128xf32> to vector<1x128xf32>
    %c0_17 = arith.constant 0 : index
    %34 = arith.index_cast %c1_i32 : i32 to index
    %c0_18 = arith.constant 0 : index
    %c0_19 = arith.constant 0 : index
    %35 = vector.load %arg5[%c0_17, %34, %c0_18, %c0_19] : memref<1x8x16x128xbf16, #tpu.memory_space<vmem>>, vector<1x1x16x128xbf16>
    %36 = vector.shape_cast %35 : vector<1x1x16x128xbf16> to vector<1x16x128xbf16>
    %37 = vector.shape_cast %36 : vector<1x16x128xbf16> to vector<16x128xbf16>
    %c0_20 = arith.constant 0 : index
    %38 = arith.index_cast %c1_i32 : i32 to index
    %c0_21 = arith.constant 0 : index
    %c0_22 = arith.constant 0 : index
    %39 = vector.load %arg6[%c0_20, %38, %c0_21, %c0_22] : memref<1x8x16x128xbf16, #tpu.memory_space<vmem>>, vector<1x1x16x128xbf16>
    %40 = vector.shape_cast %39 : vector<1x1x16x128xbf16> to vector<1x16x128xbf16>
    %41 = vector.shape_cast %40 : vector<1x16x128xbf16> to vector<16x128xbf16>
    %42 = arith.extf %37 : vector<16x128xbf16> to vector<16x128xf32>
    %43 = arith.extf %41 : vector<16x128xbf16> to vector<16x128xf32>
    %44 = vector.broadcast %30 : vector<1x128xf32> to vector<16x128xf32>
    %45 = arith.mulf %44, %42 : vector<16x128xf32>
    %46 = arith.addf %19, %45 : vector<16x128xf32>
    %47 = vector.broadcast %33 : vector<1x128xf32> to vector<16x128xf32>
    %48 = arith.mulf %47, %43 : vector<16x128xf32>
    %49 = arith.addf %22, %48 : vector<16x128xf32>
    %50 = arith.addf %30, %33 : vector<1x128xf32>
    %51 = arith.addf %42, %43 : vector<16x128xf32>
    %52 = vector.broadcast %50 : vector<1x128xf32> to vector<16x128xf32>
    %53 = arith.mulf %52, %51 : vector<16x128xf32>
    %54 = arith.addf %27, %53 : vector<16x128xf32>
    %c2_i32 = arith.constant 2 : i32
    %c0_23 = arith.constant 0 : index
    %c0_24 = arith.constant 0 : index
    %55 = arith.index_cast %c2_i32 : i32 to index
    %c0_25 = arith.constant 0 : index
    %56 = vector.load %arg3[%c0_23, %c0_24, %55, %c0_25] : memref<1x1x8x128xf32, #tpu.memory_space<vmem>>, vector<1x1x1x128xf32>
    %57 = vector.shape_cast %56 : vector<1x1x1x128xf32> to vector<1x128xf32>
    %c0_26 = arith.constant 0 : index
    %c0_27 = arith.constant 0 : index
    %58 = arith.index_cast %c2_i32 : i32 to index
    %c0_28 = arith.constant 0 : index
    %59 = vector.load %arg4[%c0_26, %c0_27, %58, %c0_28] : memref<1x1x8x128xf32, #tpu.memory_space<vmem>>, vector<1x1x1x128xf32>
    %60 = vector.shape_cast %59 : vector<1x1x1x128xf32> to vector<1x128xf32>
    %c0_29 = arith.constant 0 : index
    %61 = arith.index_cast %c2_i32 : i32 to index
    %c0_30 = arith.constant 0 : index
    %c0_31 = arith.constant 0 : index
    %62 = vector.load %arg5[%c0_29, %61, %c0_30, %c0_31] : memref<1x8x16x128xbf16, #tpu.memory_space<vmem>>, vector<1x1x16x128xbf16>
    %63 = vector.shape_cast %62 : vector<1x1x16x128xbf16> to vector<1x16x128xbf16>
    %64 = vector.shape_cast %63 : vector<1x16x128xbf16> to vector<16x128xbf16>
    %c0_32 = arith.constant 0 : index
    %65 = arith.index_cast %c2_i32 : i32 to index
    %c0_33 = arith.constant 0 : index
    %c0_34 = arith.constant 0 : index
    %66 = vector.load %arg6[%c0_32, %65, %c0_33, %c0_34] : memref<1x8x16x128xbf16, #tpu.memory_space<vmem>>, vector<1x1x16x128xbf16>
    %67 = vector.shape_cast %66 : vector<1x1x16x128xbf16> to vector<1x16x128xbf16>
    %68 = vector.shape_cast %67 : vector<1x16x128xbf16> to vector<16x128xbf16>
    %69 = arith.extf %64 : vector<16x128xbf16> to vector<16x128xf32>
    %70 = arith.extf %68 : vector<16x128xbf16> to vector<16x128xf32>
    %71 = vector.broadcast %57 : vector<1x128xf32> to vector<16x128xf32>
    %72 = arith.mulf %71, %69 : vector<16x128xf32>
    %73 = arith.addf %46, %72 : vector<16x128xf32>
    %74 = vector.broadcast %60 : vector<1x128xf32> to vector<16x128xf32>
    %75 = arith.mulf %74, %70 : vector<16x128xf32>
    %76 = arith.addf %49, %75 : vector<16x128xf32>
    %77 = arith.addf %57, %60 : vector<1x128xf32>
    %78 = arith.addf %69, %70 : vector<16x128xf32>
    %79 = vector.broadcast %77 : vector<1x128xf32> to vector<16x128xf32>
    %80 = arith.mulf %79, %78 : vector<16x128xf32>
    %81 = arith.addf %54, %80 : vector<16x128xf32>
    %c3_i32 = arith.constant 3 : i32
    %c0_35 = arith.constant 0 : index
    %c0_36 = arith.constant 0 : index
    %82 = arith.index_cast %c3_i32 : i32 to index
    %c0_37 = arith.constant 0 : index
    %83 = vector.load %arg3[%c0_35, %c0_36, %82, %c0_37] : memref<1x1x8x128xf32, #tpu.memory_space<vmem>>, vector<1x1x1x128xf32>
    %84 = vector.shape_cast %83 : vector<1x1x1x128xf32> to vector<1x128xf32>
    %c0_38 = arith.constant 0 : index
    %c0_39 = arith.constant 0 : index
    %85 = arith.index_cast %c3_i32 : i32 to index
    %c0_40 = arith.constant 0 : index
    %86 = vector.load %arg4[%c0_38, %c0_39, %85, %c0_40] : memref<1x1x8x128xf32, #tpu.memory_space<vmem>>, vector<1x1x1x128xf32>
    %87 = vector.shape_cast %86 : vector<1x1x1x128xf32> to vector<1x128xf32>
    %c0_41 = arith.constant 0 : index
    %88 = arith.index_cast %c3_i32 : i32 to index
    %c0_42 = arith.constant 0 : index
    %c0_43 = arith.constant 0 : index
    %89 = vector.load %arg5[%c0_41, %88, %c0_42, %c0_43] : memref<1x8x16x128xbf16, #tpu.memory_space<vmem>>, vector<1x1x16x128xbf16>
    %90 = vector.shape_cast %89 : vector<1x1x16x128xbf16> to vector<1x16x128xbf16>
    %91 = vector.shape_cast %90 : vector<1x16x128xbf16> to vector<16x128xbf16>
    %c0_44 = arith.constant 0 : index
    %92 = arith.index_cast %c3_i32 : i32 to index
    %c0_45 = arith.constant 0 : index
    %c0_46 = arith.constant 0 : index
    %93 = vector.load %arg6[%c0_44, %92, %c0_45, %c0_46] : memref<1x8x16x128xbf16, #tpu.memory_space<vmem>>, vector<1x1x16x128xbf16>
    %94 = vector.shape_cast %93 : vector<1x1x16x128xbf16> to vector<1x16x128xbf16>
    %95 = vector.shape_cast %94 : vector<1x16x128xbf16> to vector<16x128xbf16>
    %96 = arith.extf %91 : vector<16x128xbf16> to vector<16x128xf32>
    %97 = arith.extf %95 : vector<16x128xbf16> to vector<16x128xf32>
    %98 = vector.broadcast %84 : vector<1x128xf32> to vector<16x128xf32>
    %99 = arith.mulf %98, %96 : vector<16x128xf32>
    %100 = arith.addf %73, %99 : vector<16x128xf32>
    %101 = vector.broadcast %87 : vector<1x128xf32> to vector<16x128xf32>
    %102 = arith.mulf %101, %97 : vector<16x128xf32>
    %103 = arith.addf %76, %102 : vector<16x128xf32>
    %104 = arith.addf %84, %87 : vector<1x128xf32>
    %105 = arith.addf %96, %97 : vector<16x128xf32>
    %106 = vector.broadcast %104 : vector<1x128xf32> to vector<16x128xf32>
    %107 = arith.mulf %106, %105 : vector<16x128xf32>
    %108 = arith.addf %81, %107 : vector<16x128xf32>
    %c4_i32 = arith.constant 4 : i32
    %109 = arith.subf %100, %103 : vector<16x128xf32>
    %c0_47 = arith.constant 0 : index
    %c0_48 = arith.constant 0 : index
    %c0_49 = arith.constant 0 : index
    %c0_50 = arith.constant 0 : index
    %110 = vector.load %arg7[%c0_47, %c0_48, %c0_49, %c0_50] : memref<1x1x16x128xf32, #tpu.memory_space<vmem>>, vector<1x1x16x128xf32>
    %111 = vector.shape_cast %110 : vector<1x1x16x128xf32> to vector<16x128xf32>
    %112 = vector.shape_cast %109 : vector<16x128xf32> to vector<1x1x16x128xf32>
    tpu.vector_store %arg7[%c0_47, %c0_48, %c0_49, %c0_50], %112 {strides = array<i32>} : memref<1x1x16x128xf32, #tpu.memory_space<vmem>>, vector<1x1x16x128xf32>,
    %113 = arith.subf %108, %100 : vector<16x128xf32>
    %114 = arith.subf %113, %103 : vector<16x128xf32>
    %c0_51 = arith.constant 0 : index
    %c0_52 = arith.constant 0 : index
    %c0_53 = arith.constant 0 : index
    %c0_54 = arith.constant 0 : index
    %115 = vector.load %arg8[%c0_51, %c0_52, %c0_53, %c0_54] : memref<1x1x16x128xf32, #tpu.memory_space<vmem>>, vector<1x1x16x128xf32>
    %116 = vector.shape_cast %115 : vector<1x1x16x128xf32> to vector<16x128xf32>
    %117 = vector.shape_cast %114 : vector<16x128xf32> to vector<1x1x16x128xf32>
    tpu.vector_store %arg8[%c0_51, %c0_52, %c0_53, %c0_54], %117 {strides = array<i32>} : memref<1x1x16x128xf32, #tpu.memory_space<vmem>>, vector<1x1x16x128xf32>,
    return
  }
  func.func @transform_0(%arg0: i32, %arg1: i32, %arg2: i32) -> (i32, i32, i32, i32) {
    %c0_i32 = arith.constant 0 : i32
    %c0_i32_0 = arith.constant 0 : i32
    return %arg0, %arg2, %c0_i32, %arg1 : i32, i32, i32, i32
  }
  func.func @transform_1(%arg0: i32, %arg1: i32, %arg2: i32) -> (i32, i32, i32, i32) {
    %c0_i32 = arith.constant 0 : i32
    %c0_i32_0 = arith.constant 0 : i32
    return %arg0, %arg2, %c0_i32, %arg1 : i32, i32, i32, i32
  }
  func.func @transform_2(%arg0: i32, %arg1: i32, %arg2: i32) -> (i32, i32, i32, i32) {
    %c0_i32 = arith.constant 0 : i32
    %c0_i32_0 = arith.constant 0 : i32
    %c0_i32_1 = arith.constant 0 : i32
    return %arg0, %c0_i32, %c0_i32_0, %arg1 : i32, i32, i32, i32
  }
  func.func @transform_3(%arg0: i32, %arg1: i32, %arg2: i32) -> (i32, i32, i32, i32) {
    %c0_i32 = arith.constant 0 : i32
    %c0_i32_0 = arith.constant 0 : i32
    %c0_i32_1 = arith.constant 0 : i32
    return %arg0, %c0_i32, %c0_i32_0, %arg1 : i32, i32, i32, i32
  }
  func.func @transform_4(%arg0: i32, %arg1: i32, %arg2: i32) -> (i32, i32, i32, i32) {
    %c0_i32 = arith.constant 0 : i32
    %c0_i32_0 = arith.constant 0 : i32
    return %arg0, %arg2, %c0_i32, %arg1 : i32, i32, i32, i32
  }
  func.func @transform_5(%arg0: i32, %arg1: i32, %arg2: i32) -> (i32, i32, i32, i32) {
    %c0_i32 = arith.constant 0 : i32
    %c0_i32_0 = arith.constant 0 : i32
    return %arg0, %arg2, %c0_i32, %arg1 : i32, i32, i32, i32
  }
}

</mosaic_0001>

<llo_original>
// kernel: tpu_custom_call.1
$region0: #{tpu_custom_call.1}
  #allocation0 [shape = 'u32[]', space=smem, size = 0x4, offset = 0x4, fixed_abs, tag = 'smem constant byte address 0x4 - core index']
  #allocation1 [shape = 'u32[72,128]{1,0:T(1,128)}', space=vmem, size = 0x9000, scoped, tag = 'internal scratch']
  %s0 = inlined_call_operand.hbm [shape: f32[4,2,8,128], index: 0, kind: input, shape index: {}]
  %s1 = inlined_call_operand.hbm [shape: f32[4,2,8,128], index: 1, kind: input, shape index: {}]
  %s2 = inlined_call_operand.hbm [shape: bf16[4,8,16,128], index: 2, kind: input, shape index: {}]
  %s3 = inlined_call_operand.hbm [shape: bf16[4,8,16,128], index: 3, kind: input, shape index: {}]
  %s4 = inlined_call_operand.hbm [shape: f32[4,2,16,128], index: 4, kind: output, shape index: {0}]
  %s5 = inlined_call_operand.hbm [shape: f32[4,2,16,128], index: 5, kind: output, shape index: {1}]
  %6 = xla_tuple %s4, %s5
  %s7 = sld [smem:[#allocation0]]
  $region73: #{tpu_custom_call.1} parent=0
    _
  %s9 = ssub.s32 1, %s7
  %s10 = scalar_select 0, %s9, %s7
  $region1: #{tpu_custom_call.1} parent=0
    #allocation2 [shape = 'u8[8192]{0}', space=vmem, size = 0x2000, scoped, tag = 'input window, operand 0']
    #allocation3 [shape = 's32[2]{0}', space=sflag, size = 0x8, scoped, tag = 'scoped memory for tpu_custom_call.1']
    #allocation4 [shape = 's32[2]{0}', space=sflag, size = 0x8, scoped, tag = 'scoped memory for tpu_custom_call.1']
    #allocation5 [shape = 'u8[8192]{0}', space=vmem, size = 0x2000, scoped, tag = 'input window, operand 1']
    #allocation6 [shape = 's32[2]{0}', space=sflag, size = 0x8, scoped, tag = 'scoped memory for tpu_custom_call.1']
    #allocation7 [shape = 'u8[65536]{0}', space=vmem, size = 0x10000, scoped, tag = 'input window, operand 2']
    #allocation8 [shape = 'u8[65536]{0}', space=vmem, size = 0x10000, scoped, tag = 'input window, operand 3']
    #allocation9 [shape = 's32[2]{0}', space=sflag, size = 0x8, scoped, tag = 'scoped memory for tpu_custom_call.1']
    #allocation10 [shape = 'u8[16384]{0}', space=vmem, size = 0x4000, scoped, tag = 'output window, operand 0']
    #allocation11 [shape = 'u8[16384]{0}', space=vmem, size = 0x4000, scoped, tag = 'output window, operand 1']
    #allocation12 [shape = 's32[2]{0}', space=sflag, size = 0x8, scoped, tag = 'scoped memory for tpu_custom_call.1']
    %11 = vsyncpa [#allocation3], 0
    %s12 = scalar_lea.sflag [#allocation3], 1
    %13 = vsyncpa %s12, 0
    %14 = vsyncpa [#allocation6], 0
    %s15 = scalar_lea.sflag [#allocation6], 1
    %16 = vsyncpa %s15, 0
    %17 = vsyncpa [#allocation9], 0
    %s18 = scalar_lea.sflag [#allocation9], 1
    %19 = vsyncpa %s18, 0
    %20 = vsyncpa [#allocation4], 0
    %s21 = scalar_lea.sflag [#allocation4], 1
    %22 = vsyncpa %s21, 0
    %23 = vsyncpa [#allocation12], 0
    %s24 = scalar_lea.sflag [#allocation12], 1
    %25 = vsyncpa %s24, 0
    loop: start=0, step=1, limit=10
    $region2: #{tpu_custom_call.1} parent=1 // loop_pre_header
      _
    $region3: #{tpu_custom_call.1} parent=1 // loop_header
      %s27 = sphi 0, %s31
      %p28 = scmp.ge.s32.totalorder %s27, 10
      %s34 = sphi 0, %s53
      %s35 = sphi 0, %s49
      %s36 = sphi 0, %s45
      %s37 = sphi 0, %s34
      %s38 = sphi 0, %s35
      %s39 = sphi 0, %s36
      %s40 = sphi 0, %s37
      %s41 = sphi 0, %s38
      %s42 = sphi 0, %s39
      %s60 = sphi 0, %s62
      %s63 = sphi 0, %s60
      %s64 = sphi 0, %s63
      %s80 = sphi 0, %s64
      %s90 = sphi 0, %s92
      %s93 = sphi 0, %s90
      %s94 = sphi 0, %s93
      %s110 = sphi 0, %s94
      %s118 = sphi 0, %s120
      %s121 = sphi 0, %s118
      %s122 = sphi 0, %s121
      %s138 = sphi 0, %s122
      %s146 = sphi 0, %s148
      %s149 = sphi 0, %s146
      %s150 = sphi 0, %s149
      %s166 = sphi 0, %s150
      %s176 = sphi 0, %s178
      %s179 = sphi 0, %s176
      %s180 = sphi 0, %s179
      %s196 = sphi 0, %s180
      %s206 = sphi 0, %s208
      %s209 = sphi 0, %s206
      %s210 = sphi 0, %s209
      %s226 = sphi 0, %s210
    $region4: #{tpu_custom_call.1} parent=1 // loop_header_branch
      %30 = sbr.rel (%p28) target = $region8
    $region5: #{tpu_custom_call.1} parent=1 // loop_body
      %s32 = ssub.s32 %s27, 1
      %s33 = ssub.s32 %s27, 2
      %s43 = sadd.s32 1, %s36
      %p44 = scmp.ge.s32.totalorder %s43, 2
      %s45 = scalar_select %p44, 0, %s43
      %s46 = sadd.s32 1, %s35
      %s47 = scalar_select %p44, %s46, %s35
      %p48 = scmp.ge.s32.totalorder %s47, 1
      %s49 = scalar_select %p48, 0, %s47
      %s50 = sadd.s32 1, %s34
      %s51 = scalar_select %p48, %s50, %s34
      %p52 = scmp.ge.s32.totalorder %s51, 4
      %s53 = scalar_select %p52, 0, %s51
      %s54 = ssub.s32 %s34, %s53
      %s55 = ssub.s32 %s36, %s45
      %s56 = sor.u32 %s54, %s55
      %s57 = ssub.s32 %s35, %s49
      %s58 = sor.u32 %s56, %s57
      %p59 = scmp.eq.s32.totalorder %s58, 0
      %s61 = sadd.s32 %s60, 1
      %s62 = scalar_select %p59, %s60, %s61
      %p65 = pneg %p59
      %p66 = scmp.eq.s32.totalorder %s27, 7
      %p67 = por %p65, %p66
      %p68 = scmp.ne.s32.totalorder %s60, %s63
      %p69 = scmp.eq.s32.totalorder %s27, 0
      %p70 = por %p68, %p69
      %p71 = scmp.ne.s32.totalorder %s60, %s63
      %p72 = scmp.eq.s32.totalorder %s32, 7
      %p73 = por %p71, %p72
      %p74 = scmp.ne.s32.totalorder %s63, %s64
      %p75 = scmp.eq.s32.totalorder %s32, 0
      %p76 = por %p74, %p75
      %p77 = scmp.ne.s32.totalorder %s63, %s64
      %p78 = scmp.eq.s32.totalorder %s33, 7
      %p79 = por %p77, %p78
      %p81 = scmp.ne.s32.totalorder %s64, %s80
      %p82 = scmp.eq.s32.totalorder %s33, 0
      %p83 = por %p81, %p82
      %s84 = ssub.s32 %s34, %s53
      %s85 = ssub.s32 %s36, %s45
      %s86 = sor.u32 %s84, %s85
      %s87 = ssub.s32 %s35, %s49
      %s88 = sor.u32 %s86, %s87
      %p89 = scmp.eq.s32.totalorder %s88, 0
      %s91 = sadd.s32 %s90, 1
      %s92 = scalar_select %p89, %s90, %s91
      %p95 = pneg %p89
      %p96 = scmp.eq.s32.totalorder %s27, 7
      %p97 = por %p95, %p96
      %p98 = scmp.ne.s32.totalorder %s90, %s93
      %p99 = scmp.eq.s32.totalorder %s27, 0
      %p100 = por %p98, %p99
      %p101 = scmp.ne.s32.totalorder %s90, %s93
      %p102 = scmp.eq.s32.totalorder %s32, 7
      %p103 = por %p101, %p102
      %p104 = scmp.ne.s32.totalorder %s93, %s94
      %p105 = scmp.eq.s32.totalorder %s32, 0
      %p106 = por %p104, %p105
      %p107 = scmp.ne.s32.totalorder %s93, %s94
      %p108 = scmp.eq.s32.totalorder %s33, 7
      %p109 = por %p107, %p108
      %p111 = scmp.ne.s32.totalorder %s94, %s110
      %p112 = scmp.eq.s32.totalorder %s33, 0
      %p113 = por %p111, %p112
      %s114 = ssub.s32 %s34, %s53
      %s115 = ssub.s32 %s35, %s49
      %s116 = sor.u32 %s114, %s115
      %p117 = scmp.eq.s32.totalorder %s116, 0
      %s119 = sadd.s32 %s118, 1
      %s120 = scalar_select %p117, %s118, %s119
      %p123 = pneg %p117
      %p124 = scmp.eq.s32.totalorder %s27, 7
      %p125 = por %p123, %p124
      %p126 = scmp.ne.s32.totalorder %s118, %s121
      %p127 = scmp.eq.s32.totalorder %s27, 0
      %p128 = por %p126, %p127
      %p129 = scmp.ne.s32.totalorder %s118, %s121
      %p130 = scmp.eq.s32.totalorder %s32, 7
      %p131 = por %p129, %p130
      %p132 = scmp.ne.s32.totalorder %s121, %s122
      %p133 = scmp.eq.s32.totalorder %s32, 0
      %p134 = por %p132, %p133
      %p135 = scmp.ne.s32.totalorder %s121, %s122
      %p136 = scmp.eq.s32.totalorder %s33, 7
      %p137 = por %p135, %p136
      %p139 = scmp.ne.s32.totalorder %s122, %s138
      %p140 = scmp.eq.s32.totalorder %s33, 0
      %p141 = por %p139, %p140
      %s142 = ssub.s32 %s34, %s53
      %s143 = ssub.s32 %s35, %s49
      %s144 = sor.u32 %s142, %s143
      %p145 = scmp.eq.s32.totalorder %s144, 0
      %s147 = sadd.s32 %s146, 1
      %s148 = scalar_select %p145, %s146, %s147
      %p151 = pneg %p145
      %p152 = scmp.eq.s32.totalorder %s27, 7
      %p153 = por %p151, %p152
      %p154 = scmp.ne.s32.totalorder %s146, %s149
      %p155 = scmp.eq.s32.totalorder %s27, 0
      %p156 = por %p154, %p155
      %p157 = scmp.ne.s32.totalorder %s146, %s149
      %p158 = scmp.eq.s32.totalorder %s32, 7
      %p159 = por %p157, %p158
      %p160 = scmp.ne.s32.totalorder %s149, %s150
      %p161 = scmp.eq.s32.totalorder %s32, 0
      %p162 = por %p160, %p161
      %p163 = scmp.ne.s32.totalorder %s149, %s150
      %p164 = scmp.eq.s32.totalorder %s33, 7
      %p165 = por %p163, %p164
      %p167 = scmp.ne.s32.totalorder %s150, %s166
      %p168 = scmp.eq.s32.totalorder %s33, 0
      %p169 = por %p167, %p168
      %s170 = ssub.s32 %s34, %s53
      %s171 = ssub.s32 %s36, %s45
      %s172 = sor.u32 %s170, %s171
      %s173 = ssub.s32 %s35, %s49
      %s174 = sor.u32 %s172, %s173
      %p175 = scmp.eq.s32.totalorder %s174, 0
      %s177 = sadd.s32 %s176, 1
      %s178 = scalar_select %p175, %s176, %s177
      %p181 = pneg %p175
      %p182 = scmp.eq.s32.totalorder %s27, 7
      %p183 = por %p181, %p182
      %p184 = scmp.ne.s32.totalorder %s176, %s179
      %p185 = scmp.eq.s32.totalorder %s27, 0
      %p186 = por %p184, %p185
      %p187 = scmp.ne.s32.totalorder %s176, %s179
      %p188 = scmp.eq.s32.totalorder %s32, 7
      %p189 = por %p187, %p188
      %p190 = scmp.ne.s32.totalorder %s179, %s180
      %p191 = scmp.eq.s32.totalorder %s32, 0
      %p192 = por %p190, %p191
      %p193 = scmp.ne.s32.totalorder %s179, %s180
      %p194 = scmp.eq.s32.totalorder %s33, 7
      %p195 = por %p193, %p194
      %p197 = scmp.ne.s32.totalorder %s180, %s196
      %p198 = scmp.eq.s32.totalorder %s33, 0
      %p199 = por %p197, %p198
      %s200 = ssub.s32 %s34, %s53
      %s201 = ssub.s32 %s36, %s45
      %s202 = sor.u32 %s200, %s201
      %s203 = ssub.s32 %s35, %s49
      %s204 = sor.u32 %s202, %s203
      %p205 = scmp.eq.s32.totalorder %s204, 0
      %s207 = sadd.s32 %s206, 1
      %s208 = scalar_select %p205, %s206, %s207
      %p211 = pneg %p205
      %p212 = scmp.eq.s32.totalorder %s27, 7
      %p213 = por %p211, %p212
      %p214 = scmp.ne.s32.totalorder %s206, %s209
      %p215 = scmp.eq.s32.totalorder %s27, 0
      %p216 = por %p214, %p215
      %p217 = scmp.ne.s32.totalorder %s206, %s209
      %p218 = scmp.eq.s32.totalorder %s32, 7
      %p219 = por %p217, %p218
      %p220 = scmp.ne.s32.totalorder %s209, %s210
      %p221 = scmp.eq.s32.totalorder %s32, 0
      %p222 = por %p220, %p221
      %p223 = scmp.ne.s32.totalorder %s209, %s210
      %p224 = scmp.eq.s32.totalorder %s33, 7
      %p225 = por %p223, %p224
      %p227 = scmp.ne.s32.totalorder %s210, %s226
      %p228 = scmp.eq.s32.totalorder %s33, 0
      %p229 = por %p227, %p228
      %p230 = scmp.le.s32.totalorder 1, %s27
      %p231 = scmp.lt.s32.totalorder %s27, 9
      %p232 = pnand %p230, %p231
      %p233 = pneg %p232
      // Predicated region
      $region9: #{tpu_custom_call.1} parent=5 // pred_check
        _
      $region10: #{tpu_custom_call.1} parent=5 // pred_check_branch
        %235 = sbr.rel (%p232) target = $region12
      $region11: #{tpu_custom_call.1} parent=5 // pred_region
        %s236 = ssub.s32 %s27, 1
      $region12: #{tpu_custom_call.1} parent=5 // pred_fallthru
        _
      %p237 = scmp.lt.s32.totalorder %s27, 8
      // Predicated region
      $region13: #{tpu_custom_call.1} parent=5 // pred_check
        %p238 = pneg %p237
      $region14: #{tpu_custom_call.1} parent=5 // pred_check_branch
        %240 = sbr.rel (%p238) target = $region16
      $region15: #{tpu_custom_call.1} parent=5 // pred_region
        // Predicated region
        $region17: #{tpu_custom_call.1} parent=15 // pred_check
          %p241 = pneg %p70
        $region18: #{tpu_custom_call.1} parent=15 // pred_check_branch
          %243 = sbr.rel (%p241) target = $region20
        $region19: #{tpu_custom_call.1} parent=15 // pred_region
          %s244 = sand.u32 %s60, 1
          %s245 = scalar_lea.sflag [#allocation3], %s244
          %s246 = sand.u32 %s60, 1
          %s247 = smul.addr %s246, 8
          %s248 = scalar_lea.vmem [#allocation2], %s247
          %250 = vsyncadd %s245, 0
          %s251 = sadd.s32 %s35, %s36
          %s252 = smul.addr %s34, 2
          %s253 = sadd.s32 %s251, %s252
          %s254 = smul.addr %s253, 8
          %s255 = scalar_lea.hbm %s0, %s254
          %s257 = sshll.u32 %s255, 4
          %s258 = int_to_ptr.hbm [resolvable:$true] %s257
          %s259 = sshll.u32 %s248, 4
          %s260 = int_to_ptr.vmem [resolvable:$true] %s259
          %262 = dma.hbm_to_vmem [thread:$0]  %s258, 128, %s260, %s245
        $region20: #{tpu_custom_call.1} parent=15 // pred_fallthru
          _
        // Predicated region
        $region21: #{tpu_custom_call.1} parent=15 // pred_check
          %p263 = pneg %p100
        $region22: #{tpu_custom_call.1} parent=15 // pred_check_branch
          %265 = sbr.rel (%p263) target = $region24
        $region23: #{tpu_custom_call.1} parent=15 // pred_region
          %s266 = sand.u32 %s27, 1
          %s267 = scalar_lea.sflag [#allocation6], %s266
          %s268 = sand.u32 %s90, 1
          %s269 = smul.addr %s268, 8
          %s270 = scalar_lea.vmem [#allocation5], %s269
          %272 = vsyncadd %s267, 0
          %s273 = sadd.s32 %s35, %s36
          %s274 = smul.addr %s34, 2
          %s275 = sadd.s32 %s273, %s274
          %s276 = smul.addr %s275, 8
          %s277 = scalar_lea.hbm %s1, %s276
          %s279 = sshll.u32 %s277, 4
          %s280 = int_to_ptr.hbm [resolvable:$true] %s279
          %s281 = sshll.u32 %s270, 4
          %s282 = int_to_ptr.vmem [resolvable:$true] %s281
          %284 = dma.hbm_to_vmem [thread:$0]  %s280, 128, %s282, %s267
        $region24: #{tpu_custom_call.1} parent=15 // pred_fallthru
          _
        // Predicated region
        $region25: #{tpu_custom_call.1} parent=15 // pred_check
          %p285 = pneg %p128
        $region26: #{tpu_custom_call.1} parent=15 // pred_check_branch
          %287 = sbr.rel (%p285) target = $region28
        $region27: #{tpu_custom_call.1} parent=15 // pred_region
          %s288 = sand.u32 %s27, 1
          %s289 = scalar_lea.sflag [#allocation6], %s288
          %s290 = sand.u32 %s118, 1
          %s291 = smul.addr %s290, 64
          %s292 = scalar_lea.vmem [#allocation7], %s291
          %294 = vsyncadd %s289, 0
          %s295 = smul.addr %s34, 16
          %s296 = sadd.s32 %s35, %s295
          %s297 = smul.addr %s296, 4
          %s298 = scalar_lea.hbm %s2, %s297
          %s299 = sshll.u32 %s298, 4
          %s300 = int_to_ptr.hbm [resolvable:$true] %s299
          %s301 = sshll.u32 %s292, 4
          %s302 = int_to_ptr.vmem [resolvable:$true] %s301
          %307 = dma.hbm_to_vmem [thread:$0]  %s300, 1024, %s302, %s289, 64, 64, 4
        $region28: #{tpu_custom_call.1} parent=15 // pred_fallthru
          _
        // Predicated region
        $region29: #{tpu_custom_call.1} parent=15 // pred_check
          %p308 = pneg %p156
        $region30: #{tpu_custom_call.1} parent=15 // pred_check_branch
          %310 = sbr.rel (%p308) target = $region32
        $region31: #{tpu_custom_call.1} parent=15 // pred_region
          %s311 = sand.u32 %s146, 1
          %s312 = scalar_lea.sflag [#allocation9], %s311
          %s313 = sand.u32 %s146, 1
          %s314 = smul.addr %s313, 64
          %s315 = scalar_lea.vmem [#allocation8], %s314
          %317 = vsyncadd %s312, 0
          %s318 = smul.addr %s34, 16
          %s319 = sadd.s32 %s35, %s318
          %s320 = smul.addr %s319, 4
          %s321 = scalar_lea.hbm %s3, %s320
          %s322 = sshll.u32 %s321, 4
          %s323 = int_to_ptr.hbm [resolvable:$true] %s322
          %s324 = sshll.u32 %s315, 4
          %s325 = int_to_ptr.vmem [resolvable:$true] %s324
          %330 = dma.hbm_to_vmem [thread:$0]  %s323, 1024, %s325, %s312, 64, 64, 4
        $region32: #{tpu_custom_call.1} parent=15 // pred_fallthru
          _
      $region16: #{tpu_custom_call.1} parent=5 // pred_fallthru
        _
      %p331 = scmp.le.s32.totalorder 1, %s27
      %p332 = scmp.lt.s32.totalorder %s27, 9
      %p333 = pnand %p331, %p332
      %p334 = pneg %p333
      // Predicated region
      $region33: #{tpu_custom_call.1} parent=5 // pred_check
        _
      $region34: #{tpu_custom_call.1} parent=5 // pred_check_branch
        %336 = sbr.rel (%p333) target = $region36
      $region35: #{tpu_custom_call.1} parent=5 // pred_region
        %s337 = ssub.s32 %s27, 1
        %s338 = sand.u32 %s63, 1
        %s339 = scalar_lea.sflag [#allocation3], %s338
        %s340 = sand.u32 %s63, 1
        %s341 = smul.addr %s340, 8
        %s342 = scalar_lea.vmem [#allocation2], %s341
        // Predicated region
        $region37: #{tpu_custom_call.1} parent=35 // pred_check
          %p343 = pneg %p76
        $region38: #{tpu_custom_call.1} parent=35 // pred_check_branch
          %345 = sbr.rel (%p343) target = $region40
        $region39: #{tpu_custom_call.1} parent=35 // pred_region
          %347 = dma.done %s339, 128
        $region40: #{tpu_custom_call.1} parent=35 // pred_fallthru
          _
        %s348 = sand.u32 %s32, 1
        %s349 = scalar_lea.sflag [#allocation6], %s348
        %s350 = sand.u32 %s93, 1
        %s351 = smul.addr %s350, 8
        %s352 = scalar_lea.vmem [#allocation5], %s351
        // Predicated region
        $region41: #{tpu_custom_call.1} parent=35 // pred_check
          %p353 = pneg %p106
        $region42: #{tpu_custom_call.1} parent=35 // pred_check_branch
          %355 = sbr.rel (%p353) target = $region44
        $region43: #{tpu_custom_call.1} parent=35 // pred_region
          %357 = dma.done %s349, 128
        $region44: #{tpu_custom_call.1} parent=35 // pred_fallthru
          _
        %s358 = sand.u32 %s32, 1
        %s359 = scalar_lea.sflag [#allocation6], %s358
        %s360 = sand.u32 %s121, 1
        %s361 = smul.addr %s360, 64
        %s362 = scalar_lea.vmem [#allocation7], %s361
        // Predicated region
        $region45: #{tpu_custom_call.1} parent=35 // pred_check
          %p363 = pneg %p134
        $region46: #{tpu_custom_call.1} parent=35 // pred_check_branch
          %365 = sbr.rel (%p363) target = $region48
        $region47: #{tpu_custom_call.1} parent=35 // pred_region
          %367 = dma.done %s359, 1024
        $region48: #{tpu_custom_call.1} parent=35 // pred_fallthru
          _
        %s368 = sand.u32 %s149, 1
        %s369 = scalar_lea.sflag [#allocation9], %s368
        %s370 = sand.u32 %s149, 1
        %s371 = smul.addr %s370, 64
        %s372 = scalar_lea.vmem [#allocation8], %s371
        // Predicated region
        $region49: #{tpu_custom_call.1} parent=35 // pred_check
          %p373 = pneg %p162
        $region50: #{tpu_custom_call.1} parent=35 // pred_check_branch
          %375 = sbr.rel (%p373) target = $region52
        $region51: #{tpu_custom_call.1} parent=35 // pred_region
          %377 = dma.done %s369, 1024
        $region52: #{tpu_custom_call.1} parent=35 // pred_fallthru
          _
        %s378 = sand.u32 %s63, 1
        %s379 = scalar_lea.sflag [#allocation3], %s378
        %s380 = sand.u32 %s63, 1
        %s381 = smul.addr %s380, 8
        %s382 = scalar_lea.vmem [#allocation2], %s381
        %p383 = pneg %p76
        %p384 = pneg %p73
        %s385 = sand.u32 %s32, 1
        %s386 = scalar_lea.sflag [#allocation6], %s385
        %s387 = sand.u32 %s93, 1
        %s388 = smul.addr %s387, 8
        %s389 = scalar_lea.vmem [#allocation5], %s388
        %p390 = pneg %p106
        %p391 = pneg %p103
        %s392 = sand.u32 %s32, 1
        %s393 = scalar_lea.sflag [#allocation6], %s392
        %s394 = sand.u32 %s121, 1
        %s395 = smul.addr %s394, 64
        %s396 = scalar_lea.vmem [#allocation7], %s395
        %p397 = pneg %p134
        %p398 = pneg %p131
        %s399 = sand.u32 %s149, 1
        %s400 = scalar_lea.sflag [#allocation9], %s399
        %s401 = sand.u32 %s149, 1
        %s402 = smul.addr %s401, 64
        %s403 = scalar_lea.vmem [#allocation8], %s402
        %p404 = pneg %p162
        %p405 = pneg %p159
        %p406 = pneg %p192
        %p407 = pneg %p189
        %s408 = sand.u32 %s179, 1
        %s409 = scalar_lea.sflag [#allocation4], %s408
        %s410 = sand.u32 %s179, 1
        %s411 = smul.addr %s410, 16
        %s412 = scalar_lea.vmem [#allocation10], %s411
        %p413 = pneg %p222
        %p414 = pneg %p219
        %s415 = sand.u32 %s209, 1
        %s416 = scalar_lea.sflag [#allocation12], %s415
        %s417 = sand.u32 %s209, 1
        %s418 = smul.addr %s417, 16
        %s419 = scalar_lea.vmem [#allocation11], %s418
        %v420 = vld [vmem:[%s342] sm:$0x1]
        %v421 = vld [vmem:[%s352] sm:$0x1]
        %v422 = vld [vmem:[%s362] sm:$0xf]
        %v423 = vld [vmem:[%s362 + $0x4] sm:$0xf]
        %v424 = vld [vmem:[%s372] sm:$0xf]
        %v425 = vld [vmem:[%s372 + $0x4] sm:$0xf]
        %v426 = vunpack.c.l.bf16 %v422
        %v427 = vunpack.c.l.bf16 %v423
        %v428 = vunpack.c.l.bf16 %v424
        %v429 = vunpack.c.l.bf16 %v425
        %v430 = vperm.slane %v420, 0
        %v431 = vmul.f32 %v430, %v426
        %v432 = vmul.f32 %v430, %v427
        %v433 = vadd.f32 %v431, 0.0
        %v434 = vadd.f32 %v432, 0.0
        %v435 = vperm.slane %v421, 0
        %v436 = vmul.f32 %v435, %v428
        %v437 = vmul.f32 %v435, %v429
        %v438 = vadd.f32 %v436, 0.0
        %v439 = vadd.f32 %v437, 0.0
        %v440 = vadd.f32 %v420, %v421
        %v441 = vadd.f32 %v426, %v428
        %v442 = vadd.f32 %v427, %v429
        %v443 = vperm.slane %v440, 0
        %v444 = vmul.f32 %v443, %v441
        %v445 = vmul.f32 %v443, %v442
        %v446 = vadd.f32 %v444, 0.0
        %v447 = vadd.f32 %v445, 0.0
        %v448 = vld [vmem:[%s342 + $0x1] sm:$0x1]
        %v449 = vld [vmem:[%s352 + $0x1] sm:$0x1]
        %s450 = scalar_lea.vmem %s362, 8 [#allocation7]
        %v451 = vld [vmem:[%s450] sm:$0xf]
        %v452 = vld [vmem:[%s450 + $0x4] sm:$0xf]
        %s453 = scalar_lea.vmem %s372, 8 [#allocation8]
        %v454 = vld [vmem:[%s453] sm:$0xf]
        %v455 = vld [vmem:[%s453 + $0x4] sm:$0xf]
        %v456 = vunpack.c.l.bf16 %v451
        %v457 = vunpack.c.l.bf16 %v452
        %v458 = vunpack.c.l.bf16 %v454
        %v459 = vunpack.c.l.bf16 %v455
        %v460 = vperm.slane %v448, 0
        %v461 = vmul.f32 %v460, %v456
        %v462 = vmul.f32 %v460, %v457
        %v463 = vadd.f32 %v433, %v461
        %v464 = vadd.f32 %v434, %v462
        %v465 = vperm.slane %v449, 0
        %v466 = vmul.f32 %v465, %v458
        %v467 = vmul.f32 %v465, %v459
        %v468 = vadd.f32 %v438, %v466
        %v469 = vadd.f32 %v439, %v467
        %v470 = vadd.f32 %v448, %v449
        %v471 = vadd.f32 %v456, %v458
        %v472 = vadd.f32 %v457, %v459
        %v473 = vperm.slane %v470, 0
        %v474 = vmul.f32 %v473, %v471
        %v475 = vmul.f32 %v473, %v472
        %v476 = vadd.f32 %v446, %v474
        %v477 = vadd.f32 %v447, %v475
        %v478 = vld [vmem:[%s342 + $0x2] sm:$0x1]
        %v479 = vld [vmem:[%s352 + $0x2] sm:$0x1]
        %s480 = scalar_lea.vmem %s362, 16 [#allocation7]
        %v481 = vld [vmem:[%s480] sm:$0xf]
        %v482 = vld [vmem:[%s480 + $0x4] sm:$0xf]
        %s483 = scalar_lea.vmem %s372, 16 [#allocation8]
        %v484 = vld [vmem:[%s483] sm:$0xf]
        %v485 = vld [vmem:[%s483 + $0x4] sm:$0xf]
        %v486 = vunpack.c.l.bf16 %v481
        %v487 = vunpack.c.l.bf16 %v482
        %v488 = vunpack.c.l.bf16 %v484
        %v489 = vunpack.c.l.bf16 %v485
        %v490 = vperm.slane %v478, 0
        %v491 = vmul.f32 %v490, %v486
        %v492 = vmul.f32 %v490, %v487
        %v493 = vadd.f32 %v463, %v491
        %v494 = vadd.f32 %v464, %v492
        %v495 = vperm.slane %v479, 0
        %v496 = vmul.f32 %v495, %v488
        %v497 = vmul.f32 %v495, %v489
        %v498 = vadd.f32 %v468, %v496
        %v499 = vadd.f32 %v469, %v497
        %v500 = vadd.f32 %v478, %v479
        %v501 = vadd.f32 %v486, %v488
        %v502 = vadd.f32 %v487, %v489
        %v503 = vperm.slane %v500, 0
        %v504 = vmul.f32 %v503, %v501
        %v505 = vmul.f32 %v503, %v502
        %v506 = vadd.f32 %v476, %v504
        %v507 = vadd.f32 %v477, %v505
        %v508 = vld [vmem:[%s342 + $0x3] sm:$0x1]
        %v509 = vld [vmem:[%s352 + $0x3] sm:$0x1]
        %s510 = scalar_lea.vmem %s362, 24 [#allocation7]
        %v511 = vld [vmem:[%s510] sm:$0xf]
        %v512 = vld [vmem:[%s510 + $0x4] sm:$0xf]
        %s513 = scalar_lea.vmem %s372, 24 [#allocation8]
        %v514 = vld [vmem:[%s513] sm:$0xf]
        %v515 = vld [vmem:[%s513 + $0x4] sm:$0xf]
        %v516 = vunpack.c.l.bf16 %v511
        %v517 = vunpack.c.l.bf16 %v512
        %v518 = vunpack.c.l.bf16 %v514
        %v519 = vunpack.c.l.bf16 %v515
        %v520 = vperm.slane %v508, 0
        %v521 = vmul.f32 %v520, %v516
        %v522 = vmul.f32 %v520, %v517
        %v523 = vadd.f32 %v493, %v521
        %v524 = vadd.f32 %v494, %v522
        %v525 = vperm.slane %v509, 0
        %v526 = vmul.f32 %v525, %v518
        %v527 = vmul.f32 %v525, %v519
        %v528 = vadd.f32 %v498, %v526
        %v529 = vadd.f32 %v499, %v527
        %v530 = vadd.f32 %v508, %v509
        %v531 = vadd.f32 %v516, %v518
        %v532 = vadd.f32 %v517, %v519
        %v533 = vperm.slane %v530, 0
        %v534 = vmul.f32 %v533, %v531
        %v535 = vmul.f32 %v533, %v532
        %v536 = vadd.f32 %v506, %v534
        %v537 = vadd.f32 %v507, %v535
        %v538 = vsub.f32 %v523, %v528
        %v539 = vsub.f32 %v524, %v529
        %540 = vst [vmem:[%s412] sm:$0xff] %v538
        %541 = vst [vmem:[%s412 + $0x8] sm:$0xff] %v539
        %v542 = vsub.f32 %v536, %v523
        %v543 = vsub.f32 %v537, %v524
        %v544 = vsub.f32 %v542, %v528
        %v545 = vsub.f32 %v543, %v529
        %546 = vst [vmem:[%s419] sm:$0xff] %v544
        %547 = vst [vmem:[%s419 + $0x8] sm:$0xff] %v545
        %s548 = sand.u32 %s179, 1
        %s549 = scalar_lea.sflag [#allocation4], %s548
        %s550 = sand.u32 %s179, 1
        %s551 = smul.addr %s550, 16
        %s552 = scalar_lea.vmem [#allocation10], %s551
        %s553 = sand.u32 %s209, 1
        %s554 = scalar_lea.sflag [#allocation12], %s553
        %s555 = sand.u32 %s209, 1
        %s556 = smul.addr %s555, 16
        %s557 = scalar_lea.vmem [#allocation11], %s556
        // Predicated region
        $region53: #{tpu_custom_call.1} parent=35 // pred_check
          %p558 = pneg %p189
        $region54: #{tpu_custom_call.1} parent=35 // pred_check_branch
          %560 = sbr.rel (%p558) target = $region56
        $region55: #{tpu_custom_call.1} parent=35 // pred_region
          %562 = vsyncadd %s549, 0
          %s563 = smul.addr %s39, 2
          %s564 = sadd.s32 %s38, %s563
          %s565 = smul.addr %s37, 4
          %s566 = sadd.s32 %s564, %s565
          %s567 = smul.addr %s566, 8
          %s568 = scalar_lea.hbm %s4, %s567
          %s569 = sshll.u32 %s552, 4
          %s570 = int_to_ptr.vmem [resolvable:$true] %s569
          %s571 = sshll.u32 %s568, 4
          %s572 = int_to_ptr.hbm [resolvable:$true] %s571
          %577 = dma.vmem_to_hbm [thread:$0]  %s570, 256, %s572, %s549, 128, 128, 8
        $region56: #{tpu_custom_call.1} parent=35 // pred_fallthru
          _
        // Predicated region
        $region57: #{tpu_custom_call.1} parent=35 // pred_check
          %p578 = pneg %p219
        $region58: #{tpu_custom_call.1} parent=35 // pred_check_branch
          %580 = sbr.rel (%p578) target = $region60
        $region59: #{tpu_custom_call.1} parent=35 // pred_region
          %582 = vsyncadd %s554, 0
          %s583 = smul.addr %s39, 2
          %s584 = sadd.s32 %s38, %s583
          %s585 = smul.addr %s37, 4
          %s586 = sadd.s32 %s584, %s585
          %s587 = smul.addr %s586, 8
          %s588 = scalar_lea.hbm %s5, %s587
          %s589 = sshll.u32 %s557, 4
          %s590 = int_to_ptr.vmem [resolvable:$true] %s589
          %s591 = sshll.u32 %s588, 4
          %s592 = int_to_ptr.hbm [resolvable:$true] %s591
          %597 = dma.vmem_to_hbm [thread:$0]  %s590, 256, %s592, %s554, 128, 128, 8
        $region60: #{tpu_custom_call.1} parent=35 // pred_fallthru
          _
      $region36: #{tpu_custom_call.1} parent=5 // pred_fallthru
        _
      %p598 = scmp.le.s32.totalorder 2, %s27
      // Predicated region
      $region61: #{tpu_custom_call.1} parent=5 // pred_check
        %p599 = pneg %p598
      $region62: #{tpu_custom_call.1} parent=5 // pred_check_branch
        %601 = sbr.rel (%p599) target = $region64
      $region63: #{tpu_custom_call.1} parent=5 // pred_region
        %s602 = ssub.s32 %s27, 2
        // Predicated region
        $region65: #{tpu_custom_call.1} parent=63 // pred_check
          %p603 = pneg %p195
        $region66: #{tpu_custom_call.1} parent=63 // pred_check_branch
          %605 = sbr.rel (%p603) target = $region68
        $region67: #{tpu_custom_call.1} parent=63 // pred_region
          %s606 = sand.u32 %s180, 1
          %s607 = scalar_lea.sflag [#allocation4], %s606
          %s608 = sand.u32 %s180, 1
          %s609 = smul.addr %s608, 16
          %s610 = scalar_lea.vmem [#allocation10], %s609
          %612 = dma.done %s607, 256
        $region68: #{tpu_custom_call.1} parent=63 // pred_fallthru
          _
        // Predicated region
        $region69: #{tpu_custom_call.1} parent=63 // pred_check
          %p613 = pneg %p225
        $region70: #{tpu_custom_call.1} parent=63 // pred_check_branch
          %615 = sbr.rel (%p613) target = $region72
        $region71: #{tpu_custom_call.1} parent=63 // pred_region
          %s616 = sand.u32 %s210, 1
          %s617 = scalar_lea.sflag [#allocation12], %s616
          %s618 = sand.u32 %s210, 1
          %s619 = smul.addr %s618, 16
          %s620 = scalar_lea.vmem [#allocation11], %s619
          %622 = dma.done %s617, 256
        $region72: #{tpu_custom_call.1} parent=63 // pred_fallthru
          _
      $region64: #{tpu_custom_call.1} parent=5 // pred_fallthru
        _
    $region6: #{tpu_custom_call.1} parent=1 // loop_footer
      %s31 = sadd.s32 1, %s27
    $region7: #{tpu_custom_call.1} parent=1 // loop_footer_branch
      %26 = sbr.rel target = $region3
    $region8: #{tpu_custom_call.1} parent=1 // loop_exit
      _
    %623 = vsyncpa [#allocation3], 1
    %s624 = scalar_lea.sflag [#allocation3], 1
    %625 = vsyncpa %s624, 1
    %626 = vsyncpa [#allocation6], 1
    %s627 = scalar_lea.sflag [#allocation6], 1
    %628 = vsyncpa %s627, 1
    %629 = vsyncpa [#allocation9], 1
    %s630 = scalar_lea.sflag [#allocation9], 1
    %631 = vsyncpa %s630, 1
    %632 = vsyncpa [#allocation4], 1
    %s633 = scalar_lea.sflag [#allocation4], 1
    %634 = vsyncpa %s633, 1
    %635 = vsyncpa [#allocation12], 1
    %s636 = scalar_lea.sflag [#allocation12], 1
    %637 = vsyncpa %s636, 1

</llo_original>
